<compile_context>
chip_gen: v7x
topology: tpu7x:2x2x1
jax: 0.10.0
libtpu: 0.0.40
codegen_flags: <defaults>
</compile_context>

<pallas_src>
import functools

import jax
import jax.numpy as jnp
from jax.experimental import pallas as pl
from jax.experimental.pallas import tpu as pltpu

_MIB = 1 << 20


def _vmem_capacity_bytes() -> int:
    """Physical VMEM per core; conservative v7x default if the query fails."""
    try:
        return int(pltpu.get_tpu_info().vmem_capacity_bytes)
    except Exception:
        return 64 * _MIB


def _sublane_pad(c: int, itemsize: int) -> int:
    mult = {4: 8, 2: 16, 1: 32}.get(itemsize, 8)
    return -(-c // mult) * mult


def _ceil_to(x: int, m: int) -> int:
    return -(-x // m) * m


def _plan_tiled(N, C, HW, itemsize, blk_target):
    """Pick (nb, tile) so one (nb, C, tile) x-block is ~blk_target padded bytes."""
    c_pad = _sublane_pad(C, itemsize)
    col_bytes = c_pad * itemsize                         # one padded lane column
    plane_bytes = col_bytes * _ceil_to(max(HW, 1), 128)  # one batch element
    if plane_bytes >= blk_target or N == 1:
        nb = 1
        lanes = max(128, (blk_target // col_bytes) // 128 * 128)
        tile = HW if lanes >= HW else lanes              # full extent or 128-multiple
    else:
        tile = HW                                        # full extent along HW
        want_nb = max(1, blk_target // plane_bytes)
        nb = max(d for d in range(1, N + 1) if N % d == 0 and d <= want_nb)
    blk_bytes = nb * col_bytes * _ceil_to(tile, 128)
    return nb, tile, blk_bytes


# ----------------------------- kernels ------------------------------------ #

def _make_fused_kernel(inv_m: float, scale: float, eps: float):
    """x resident in VMEM: exact two-pass stats + affine apply, one HBM read."""
    def kernel(x_ref, y_ref, bias_ref, logs_ref):
        x = x_ref[...].astype(jnp.float32)                       # (N, C, HW)
        s = jnp.sum(jnp.sum(x, axis=2, keepdims=True), axis=0, keepdims=True)
        bias = -s * inv_m                                        # (1, C, 1)
        xc = x + bias
        v = jnp.sum(jnp.sum(xc * xc, axis=2, keepdims=True),
                    axis=0, keepdims=True) * inv_m               # exact two-pass
        logs = jnp.log(scale / (jnp.sqrt(v) + eps))              # (1, C, 1)
        y_ref[...] = (xc * jnp.exp(logs)).astype(y_ref.dtype)
        bias_ref[...] = bias
        logs_ref[...] = logs
    return kernel


def _make_stats_kernel(tile: int, hw: int):
    """Per-(batch-block, channel) sum / sumsq over the (Gn, HW-tiles) grid."""
    need_mask = (hw % tile) != 0

    def kernel(x_ref, sum_ref, sumsq_ref):
        @pl.when(pl.program_id(1) == 0)
        def _():
            sum_ref[...] = jnp.zeros_like(sum_ref)
            sumsq_ref[...] = jnp.zeros_like(sumsq_ref)

        x = x_ref[...].astype(jnp.float32)                       # (nb, C, tile)
        if need_mask:                                            # ragged HW tail
            lane = jax.lax.broadcasted_iota(jnp.int32, (1, 1, tile), 2)
            valid = (pl.program_id(1) * tile + lane) < hw
            x = jnp.where(valid, x, 0.0)
        sum_ref[...] += jnp.sum(jnp.sum(x, axis=2, keepdims=True),
                                axis=0, keepdims=True)
        sumsq_ref[...] += jnp.sum(jnp.sum(x * x, axis=2, keepdims=True),
                                  axis=0, keepdims=True)
    return kernel


def _apply_kernel(x_ref, bias_ref, scale_ref, y_ref):
    """y = (x + bias) * exp(logs); exp(logs) precomputed in the wrapper."""
    x = x_ref[...].astype(jnp.float32)                           # (nb, C, tile)
    y = (x + bias_ref[...]) * scale_ref[...]                     # (C,1) broadcast
    y_ref[...] = y.astype(y_ref.dtype)


# ----------------------------- wrapper ------------------------------------ #

@functools.partial(jax.jit, static_argnames=("scale", "eps", "force_tiled"))
def actnorm_forward(x_nchw, sld, scale=1.0, eps=1e-6, force_tiled=False):
    """ActNorm forward (reverse=False) on the first (initializing) mini-batch."""
    N, C, H, W = x_nchw.shape
    HW = H * W
    M = N * HW
    itemsize = jnp.dtype(x_nchw.dtype).itemsize
    vmem_cap = _vmem_capacity_bytes()

    x3 = x_nchw.reshape(N, C, HW)        # contiguous NCHW view — no data movement

    # ---- fused, VMEM-resident fast path -----------------------------------
    x_pad_bytes = N * _sublane_pad(C, itemsize) * _ceil_to(HW, 128) * itemsize
    x_pad_f32 = N * _sublane_pad(C, 4) * _ceil_to(HW, 128) * 4
    fused_est = 2 * x_pad_bytes + 3 * x_pad_f32          # in + out + f32 temps
    use_fused = (not force_tiled) and fused_est <= int(0.55 * vmem_cap)

    if use_fused:
        y3, bias, logs = pl.pallas_call(
            _make_fused_kernel(1.0 / M, float(scale), float(eps)),
            out_shape=(
                jax.ShapeDtypeStruct((N, C, HW), x_nchw.dtype),
                jax.ShapeDtypeStruct((1, C, 1), jnp.float32),
                jax.ShapeDtypeStruct((1, C, 1), jnp.float32),
            ),
            compiler_params=pltpu.CompilerParams(
                vmem_limit_bytes=int(0.85 * vmem_cap)),
        )(x3)
    else:
        # ---- tiled two-pass path -------------------------------------------
        blk_target = min(4 * _MIB, vmem_cap // 12)       # >=2 MiB v5e/v6e, >=4 MiB v7x
        nb, tile, blk_bytes = _plan_tiled(N, C, HW, itemsize, blk_target)
        gn, gt = N // nb, pl.cdiv(HW, tile)
        grid = (gn, gt)
        limit = int(min(0.8 * vmem_cap, max(32 * _MIB, 6 * blk_bytes + 4 * _MIB)))

        x_spec = pl.BlockSpec((nb, C, tile), lambda n, t: (n, 0, t))
        vec_spec = pl.BlockSpec((C, 1), lambda n, t: (0, 0))
        part_spec = pl.BlockSpec((1, C, 1), lambda n, t: (n, 0, 0))

        # pass 1: per-batch-block partial sum / sumsq (batch axis megacore-parallel)
        ps, pss = pl.pallas_call(
            _make_stats_kernel(tile, HW),
            grid=grid,
            in_specs=[x_spec],
            out_specs=(part_spec, part_spec),
            out_shape=(jax.ShapeDtypeStruct((gn, C, 1), jnp.float32),
                       jax.ShapeDtypeStruct((gn, C, 1), jnp.float32)),
            compiler_params=pltpu.CompilerParams(
                dimension_semantics=("parallel", "arbitrary"),
                vmem_limit_bytes=limit),
        )(x3)

        s = jnp.sum(ps, axis=0)                          # (C, 1)
        ss = jnp.sum(pss, axis=0)                        # (C, 1)
        mean = s / M
        # Single-pass variance; clamp guards cancellation when |mean| >> std.
        var = jnp.maximum(ss / M - mean * mean, 0.0)
        bias = -mean
        logs = jnp.log(scale / (jnp.sqrt(var) + eps))
        exp_logs = jnp.exp(logs)

        # pass 2: tiled affine transform (both grid axes parallel)
        y3 = pl.pallas_call(
            _apply_kernel,
            grid=grid,
            in_specs=[x_spec, vec_spec, vec_spec],
            out_specs=pl.BlockSpec((nb, C, tile), lambda n, t: (n, 0, t)),
            out_shape=jax.ShapeDtypeStruct((N, C, HW), x_nchw.dtype),
            compiler_params=pltpu.CompilerParams(
                dimension_semantics=("parallel", "parallel"),
                vmem_limit_bytes=limit),
        )(x3, bias, exp_logs)

    sld_out = jnp.asarray(sld, jnp.float32) + jnp.sum(logs) * HW
    return (y3.reshape(N, C, H, W), sld_out,
            bias.reshape(1, C, 1, 1), logs.reshape(1, C, 1, 1))


def _reference_forward(x, sld, *, scale=1.0, eps=1e-6):
    """Plain-JAX reference mirroring the PyTorch module."""
    bias = -jnp.mean(x, axis=(0, 2, 3), keepdims=True)
    v = jnp.mean((x + bias) ** 2, axis=(0, 2, 3), keepdims=True)
    logs = jnp.log(scale / (jnp.sqrt(v) + eps))
    y = (x + bias) * jnp.exp(logs)
    ld = jnp.sum(logs) * x.shape[2] * x.shape[3]
    return y, sld + ld


if __name__ == "__main__":
    key = jax.random.PRNGKey(0)
    sld0 = jnp.float32(0.0)

    # Small shape (fused, VMEM-resident path).
    N, C, H, W = 2, 4, 16, 16
    x = jax.random.normal(key, (N, C, H, W), dtype=jnp.float32) * 2.0 + 0.5
    y, sld, bias, logs = actnorm_forward(x, sld0)
    jax.block_until_ready((y, sld, bias, logs))
    y_ref, sld_ref = _reference_forward(x, sld0, scale=1.0)
    assert y.shape == (N, C, H, W) and y.dtype == x.dtype
    assert jnp.allclose(y, y_ref, atol=1e-4, rtol=1e-4)
    assert jnp.allclose(sld, sld_ref, atol=1e-3, rtol=1e-4)

    # Same data through the tiled two-pass path.
    y2, sld2, _, _ = actnorm_forward(x, sld0, force_tiled=True)
    jax.block_until_ready((y2, sld2))
    assert jnp.allclose(y2, y_ref, atol=1e-4, rtol=1e-4)
    assert jnp.allclose(sld2, sld_ref, atol=1e-3, rtol=1e-4)

    # Larger shape with a non-128-multiple HW: exercises the cdiv grid and the
    # masked ragged-tail reduction in the tiled path.
    key2 = jax.random.split(key)[0]
    N2, C2, H2, W2 = 1, 64, 130, 130
    xb = jax.random.normal(key2, (N2, C2, H2, W2), dtype=jnp.float32) * 2.0 + 0.5
    y3, sld3, _, _ = actnorm_forward(xb, sld0, force_tiled=True)
    jax.block_until_ready((y3, sld3))
    y3_ref, sld3_ref = _reference_forward(xb, sld0, scale=1.0)
    assert jnp.allclose(y3, y3_ref, atol=1e-4, rtol=1e-4)
    assert jnp.allclose(sld3, sld3_ref, atol=1e-3, rtol=1e-4)

    print("KERNEL_OK")
</pallas_src>

<mosaic_0001>
module attributes {stable_mosaic.version = 11 : i64} {
  func.func @kernel(%arg0: memref<2x4x256xf32, #tpu.memory_space<vmem>>, %arg1: memref<2x4x256xf32, #tpu.memory_space<vmem>>, %arg2: memref<1x4x1xf32, #tpu.memory_space<vmem>>, %arg3: memref<1x4x1xf32, #tpu.memory_space<vmem>>) attributes {dimension_semantics = [], scalar_prefetch = 0 : i64, scratch_operands = 0 : i64, tpu.core_type = #tpu.core_type<tc>} {
    %c0 = arith.constant 0 : index
    %c0_0 = arith.constant 0 : index
    %c0_1 = arith.constant 0 : index
    %0 = vector.load %arg0[%c0, %c0_0, %c0_1] : memref<2x4x256xf32, #tpu.memory_space<vmem>>, vector<2x4x256xf32>
    %cst = arith.constant dense<0.000000e+00> : vector<2x4xf32>
    %1 = vector.multi_reduction <add>, %0, %cst [2] : vector<2x4x256xf32> to vector<2x4xf32>
    %2 = vector.shape_cast %1 : vector<2x4xf32> to vector<2x4x1xf32>
    %cst_2 = arith.constant dense<0.000000e+00> : vector<4x1xf32>
    %3 = vector.multi_reduction <add>, %2, %cst_2 [0] : vector<2x4x1xf32> to vector<4x1xf32>
    %4 = vector.shape_cast %3 : vector<4x1xf32> to vector<1x4x1xf32>
    %cst_3 = arith.constant 0.000000e+00 : f32
    %5 = vector.broadcast %cst_3 : f32 to vector<1x4x1xf32>
    %6 = arith.subf %5, %4 : vector<1x4x1xf32>
    %cst_4 = arith.constant 0.001953125 : f32
    %7 = vector.broadcast %cst_4 : f32 to vector<1x4x1xf32>
    %8 = arith.mulf %6, %7 : vector<1x4x1xf32>
    %9 = vector.broadcast %8 : vector<1x4x1xf32> to vector<2x4x256xf32>
    %10 = arith.addf %0, %9 : vector<2x4x256xf32>
    %11 = arith.mulf %10, %10 : vector<2x4x256xf32>
    %cst_5 = arith.constant dense<0.000000e+00> : vector<2x4xf32>
    %12 = vector.multi_reduction <add>, %11, %cst_5 [2] : vector<2x4x256xf32> to vector<2x4xf32>
    %13 = vector.shape_cast %12 : vector<2x4xf32> to vector<2x4x1xf32>
    %cst_6 = arith.constant dense<0.000000e+00> : vector<4x1xf32>
    %14 = vector.multi_reduction <add>, %13, %cst_6 [0] : vector<2x4x1xf32> to vector<4x1xf32>
    %15 = vector.shape_cast %14 : vector<4x1xf32> to vector<1x4x1xf32>
    %cst_7 = arith.constant 0.001953125 : f32
    %16 = vector.broadcast %cst_7 : f32 to vector<1x4x1xf32>
    %17 = arith.mulf %15, %16 : vector<1x4x1xf32>
    %18 = math.sqrt %17 : vector<1x4x1xf32>
    %cst_8 = arith.constant 9.99999997E-7 : f32
    %19 = vector.broadcast %cst_8 : f32 to vector<1x4x1xf32>
    %20 = arith.addf %18, %19 : vector<1x4x1xf32>
    %cst_9 = arith.constant 1.000000e+00 : f32
    %21 = vector.broadcast %cst_9 : f32 to vector<1x4x1xf32>
    %22 = arith.divf %21, %20 : vector<1x4x1xf32>
    %23 = math.log %22 : vector<1x4x1xf32>
    %24 = math.exp %23 : vector<1x4x1xf32>
    %25 = vector.broadcast %24 : vector<1x4x1xf32> to vector<2x4x256xf32>
    %26 = arith.mulf %10, %25 : vector<2x4x256xf32>
    %c0_10 = arith.constant 0 : index
    %c0_11 = arith.constant 0 : index
    %c0_12 = arith.constant 0 : index
    %27 = vector.load %arg1[%c0_10, %c0_11, %c0_12] : memref<2x4x256xf32, #tpu.memory_space<vmem>>, vector<2x4x256xf32>
    tpu.vector_store %arg1[%c0_10, %c0_11, %c0_12], %26 {strides = array<i32>} : memref<2x4x256xf32, #tpu.memory_space<vmem>>, vector<2x4x256xf32>,
    %c0_13 = arith.constant 0 : index
    %c0_14 = arith.constant 0 : index
    %c0_15 = arith.constant 0 : index
    %28 = vector.load %arg2[%c0_13, %c0_14, %c0_15] : memref<1x4x1xf32, #tpu.memory_space<vmem>>, vector<1x4x1xf32>
    tpu.vector_store %arg2[%c0_13, %c0_14, %c0_15], %8 {strides = array<i32>} : memref<1x4x1xf32, #tpu.memory_space<vmem>>, vector<1x4x1xf32>,
    %c0_16 = arith.constant 0 : index
    %c0_17 = arith.constant 0 : index
    %c0_18 = arith.constant 0 : index
    %29 = vector.load %arg3[%c0_16, %c0_17, %c0_18] : memref<1x4x1xf32, #tpu.memory_space<vmem>>, vector<1x4x1xf32>
    tpu.vector_store %arg3[%c0_16, %c0_17, %c0_18], %23 {strides = array<i32>} : memref<1x4x1xf32, #tpu.memory_space<vmem>>, vector<1x4x1xf32>,
    return
  }
}

</mosaic_0001>

<llo_original>
// kernel: actnorm_forward.1
$region0: #{actnorm_forward.1}
  #allocation0 [shape = 'u32[]', space=smem, size = 0x4, offset = 0x4, fixed_abs, tag = 'smem constant byte address 0x4 - core index']
  #allocation1 [shape = 'u32[144,128]{1,0:T(1,128)}', space=vmem, size = 0x12000, scoped, tag = 'internal scratch']
  %s0 = inlined_call_operand.vmem [shape: f32[2,4,256], index: 0, kind: input, shape index: {}]
  %s1 = inlined_call_operand.vmem [shape: f32[2,4,256], index: 1, kind: output, shape index: {0}]
  %s2 = inlined_call_operand.vmem [shape: f32[1,4,1], index: 2, kind: output, shape index: {1}]
  %s3 = inlined_call_operand.vmem [shape: f32[1,4,1], index: 3, kind: output, shape index: {2}]
  %4 = xla_tuple %s1, %s2, %s3
  %s5 = sld [smem:[#allocation0]]
  $region30: #{actnorm_forward.1} parent=0
    _
  %s7 = ssub.s32 1, %s5
  %s8 = scalar_select 0, %s7, %s5
  // Predicated region
  $region2: #{actnorm_forward.1} parent=0 // pred_check
    _
  $region3: #{actnorm_forward.1} parent=0 // pred_check_branch
    %10 = sbr.rel (0) target = $region5
  $region4: #{actnorm_forward.1} parent=0 // pred_region
    _
  $region5: #{actnorm_forward.1} parent=0 // pred_fallthru
    _
  %v11 = vld [vmem:[%s0] sm:$0xff]
  %v12 = vld [vmem:[%s0 + $0x8] sm:$0xff]
  %v15 = vcombine.high %v11, %v11
  %v16 = vcombine.high %v12, %v12
  %vm19 = vcmask 1043456
  %v20 = vsel %vm19, %v11, 0.0
  %v21 = vsel %vm19, %v15, 0.0
  %v22 = vadd.f32 %v20, %v21
  %23 = vadd.xlane.f32.xlu0 %v22
  %v24 = vpop.xlane.xlu0 %23
  %v25 = vsel %vm19, %v12, 0.0
  %v26 = vsel %vm19, %v16, 0.0
  %v27 = vadd.f32 %v25, %v26
  %28 = vadd.xlane.f32.xlu0 %v27
  %v29 = vpop.xlane.xlu0 %28
  %v30 = vsel %vm19, %v24, 0.0
  %v31 = vsel %vm19, %v29, 0.0
  %v32 = vadd.f32 %v30, %v31
  %v33 = vsub.f32 0.0, %v32
  %v34 = vmul.f32 %v33, 0.001953125
  %v37 = vunpack.c.l.s4 839922192
  %v38 = vunpack.c.0.s8 %v37
  %v39 = vlaneseq
  %v40 = vshrl.u32 %v39, 7
  %v41 = vsub.s32 %v38, %v40
  %v42 = vrot.slane %v34, %v41
  %v44 = vadd.f32 %v11, %v42
  %v45 = vadd.f32 %v12, %v42
  %v46 = vmul.f32 %v44, %v44
  %v47 = vmul.f32 %v45, %v45
  %v50 = vcombine.high %v46, %v46
  %v51 = vcombine.high %v47, %v47
  %v54 = vsel %vm19, %v46, 0.0
  %v55 = vsel %vm19, %v50, 0.0
  %v56 = vadd.f32 %v54, %v55
  %57 = vadd.xlane.f32.xlu0 %v56
  %v58 = vpop.xlane.xlu0 %57
  %v59 = vsel %vm19, %v47, 0.0
  %v60 = vsel %vm19, %v51, 0.0
  %v61 = vadd.f32 %v59, %v60
  %62 = vadd.xlane.f32.xlu0 %v61
  %v63 = vpop.xlane.xlu0 %62
  %v64 = vsel %vm19, %v58, 0.0
  %v65 = vsel %vm19, %v63, 0.0
  %v66 = vadd.f32 %v64, %v65
  %v67 = vmul.f32 %v66, 0.001953125
  %v68 = vrsqrt.pop %v67
  %v69 = vmul.f32 %v67, %v68
  %vm70 = vcmp.eq.f32.partialorder %v67, inf
  %v71 = vsel %vm70, %v67, %v69
  %vm72 = vcmp.eq.f32.partialorder %v67, 0.0
  %v73 = vand.u32 %v67, 2147483648
  %v74 = vsel %vm72, %v73, %v71
  %v75 = vadd.f32 %v74, 1e-06
  %v76 = vrcp.pop %v75
  %v77 = vmul.f32 1.0, %v76
  %v78 = vlog2.pop %v77
  %v79 = vmul.f32 %v78, 0.6931472
  %v80 = vmul.f32 %v79, 1.442695
  %v81 = vpow.pop %v80
  %v84 = vunpack.c.l.s4 839922192
  %v85 = vunpack.c.0.s8 %v84
  %v86 = vlaneseq
  %v87 = vshrl.u32 %v86, 7
  %v88 = vsub.s32 %v85, %v87
  %v89 = vrot.slane %v81, %v88
  %v91 = vmul.f32 %v44, %v89
  %v92 = vmul.f32 %v45, %v89
  %93 = vst [vmem:[%s1] sm:$0xff] %v91
  %94 = vst [vmem:[%s1 + $0x8] sm:$0xff] %v92
  %vm95 = vcmask 3072
  %96 = vst.msk [vmem:[%s2] sm:$0xf] %vm95, %v34
  %97 = vst.msk [vmem:[%s3] sm:$0xf] %vm95, %v79
  // Predicated region
  $region6: #{actnorm_forward.1} parent=0 // pred_check
    _
  $region7: #{actnorm_forward.1} parent=0 // pred_check_branch
    %99 = sbr.rel (0) target = $region9
  $region8: #{actnorm_forward.1} parent=0 // pred_region
    _
  $region9: #{actnorm_forward.1} parent=0 // pred_fallthru
    _
  // Predicated region
  $region10: #{actnorm_forward.1} parent=0 // pred_check
    _
  $region11: #{actnorm_forward.1} parent=0 // pred_check_branch
    %101 = sbr.rel (0) target = $region13
  $region12: #{actnorm_forward.1} parent=0 // pred_region
    _
  $region13: #{actnorm_forward.1} parent=0 // pred_fallthru
    _
  // Predicated region
  $region14: #{actnorm_forward.1} parent=0 // pred_check
    _
  $region15: #{actnorm_forward.1} parent=0 // pred_check_branch
    %103 = sbr.rel (0) target = $region17
  $region16: #{actnorm_forward.1} parent=0 // pred_region
    _
  $region17: #{actnorm_forward.1} parent=0 // pred_fallthru
    _
  // Predicated region
  $region18: #{actnorm_forward.1} parent=0 // pred_check
    _
  $region19: #{actnorm_forward.1} parent=0 // pred_check_branch
    %105 = sbr.rel (0) target = $region21
  $region20: #{actnorm_forward.1} parent=0 // pred_region
    _
  $region21: #{actnorm_forward.1} parent=0 // pred_fallthru
    _
  // Predicated region
  $region22: #{actnorm_forward.1} parent=0 // pred_check
    _
  $region23: #{actnorm_forward.1} parent=0 // pred_check_branch
    %107 = sbr.rel (0) target = $region25
  $region24: #{actnorm_forward.1} parent=0 // pred_region
    _
  $region25: #{actnorm_forward.1} parent=0 // pred_fallthru
    _
  // Predicated region
  $region26: #{actnorm_forward.1} parent=0 // pred_check
    _
  $region27: #{actnorm_forward.1} parent=0 // pred_check_branch
    %109 = sbr.rel (0) target = $region29
  $region28: #{actnorm_forward.1} parent=0 // pred_region
    _
  $region29: #{actnorm_forward.1} parent=0 // pred_fallthru
    _

</llo_original>
